<compile_context>
chip_gen: v7x
topology: tpu7x:2x2x1
jax: 0.10.0
libtpu: 0.0.40
codegen_flags: <defaults>
</compile_context>

<pallas_src>
import functools

import numpy as np
import jax
import jax.numpy as jnp
from jax.experimental import pallas as pl
from jax.experimental.pallas import tpu as pltpu


def _round_up(x, m):
    return ((x + m - 1) // m) * m


# ----------------------------------------------------------------------------
# Fused kernel: conv3x3 + ReLU + fused (cls|reg) heads + sigmoid score
#               + dxdydwdh->xywh->xyxy decode + clamp   (all lane-dense)
# ----------------------------------------------------------------------------
def _rpn_fused_kernel(C, H, W, A, P, Lo_pad,
                      x_ref, aux_ref, w3_ref, b3_ref, wcr_ref, bcr_ref,
                      out_ref):
    x = x_ref[0]                                           # (C, Gpad) bf16

    # ---- 3x3 conv over in-kernel shifted lane views --------------------------
    if C >= 128:
        # nine accumulating K=C matmuls: no (9C, Lo) concat buffer in VMEM
        # (matters for v7x 64 MiB VMEM at production C / feature sizes).
        feat = jnp.zeros((C, Lo_pad), jnp.float32)
        k = 0
        for ky in range(3):
            for kx in range(3):
                off = ky * P + kx
                feat = feat + jnp.dot(w3_ref[:, k * C:(k + 1) * C],
                                      x[:, off:off + Lo_pad],
                                      preferred_element_type=jnp.float32)
                k += 1
    else:
        # small C: ONE stacked K=9C matmul keeps MXU K-utilization up.
        taps = [x[:, ky * P + kx: ky * P + kx + Lo_pad]
                for ky in range(3) for kx in range(3)]     # nine (C, Lo_pad) views
        patches = jnp.concatenate(taps, axis=0)            # (9C, Lo_pad) bf16
        feat = jnp.dot(w3_ref[...], patches,
                       preferred_element_type=jnp.float32)
    feat = jnp.maximum(feat + b3_ref[...], 0.0)            # ReLU(conv3x3 + b), f32

    # ---- fused cls+reg heads: one (5A, C) @ (C, Lo_pad) bf16 matmul -----------
    head = jnp.dot(wcr_ref[...], feat.astype(jnp.bfloat16),
                   preferred_element_type=jnp.float32) + bcr_ref[...]  # (5A, Lo_pad)

    c0  = head[0 * A:1 * A, :]        # cls logit 0, all anchors
    c1  = head[1 * A:2 * A, :]        # cls logit 1
    dxs = head[2 * A:3 * A, :]        # dx * anchor_w (scaling folded into weights)
    dys = head[3 * A:4 * A, :]        # dy * anchor_h
    dw  = head[4 * A:5 * A, :]

    ax = aux_ref[0:1, :]              # (1, Lo_pad) frame column index (exact ints)
    ay = aux_ref[1:2, :]              # (1, Lo_pad) frame row index
    aw = aux_ref[2:2 + A, :]          # (A, Lo_pad) per-anchor width planes
    ah = aux_ref[2 + A:2 + 2 * A, :]  # (A, Lo_pad) per-anchor height planes

    # sigmoid == softmax over 2 classes, picked class 1: one exp + one recip
    score = pl.reciprocal(1.0 + jnp.exp(c0 - c1), approx=True)

    xc = dxs + ax
    yc = dys + ay
    ew = jnp.exp(dw)
    bw = ew * aw
    bh = ew * ah   # NOTE: reference dxdydwdh2xywh uses d[..., 2] for BOTH w and h
    x1 = jnp.clip(xc - 0.5 * bw, 0.0, float(W - 1))
    y1 = jnp.clip(yc - 0.5 * bh, 0.0, float(H - 1))
    x2 = jnp.clip(xc + 0.5 * bw, 0.0, float(W - 1))
    y2 = jnp.clip(yc + 0.5 * bh, 0.0, float(H - 1))

    # five grouped multi-row stores (field-major, anchor-minor rows)
    out_ref[0, 0 * A:1 * A, :] = score
    out_ref[0, 1 * A:2 * A, :] = x1
    out_ref[0, 2 * A:3 * A, :] = y1
    out_ref[0, 3 * A:4 * A, :] = x2
    out_ref[0, 4 * A:5 * A, :] = y2


def _vmem_limit_bytes():
    # Generation-aware: ~half of physical VMEM (leaves headroom on v7x's 64 MiB;
    # lets v5e/v6e (128 MiB) keep bigger whole-map blocks at production shapes).
    try:
        cap = int(pltpu.get_tpu_info().vmem_capacity_bytes)
        return int(min(64 * 1024 * 1024, max(32 * 1024 * 1024, cap // 2)))
    except Exception:
        return 32 * 1024 * 1024


def _build_fused_call(bs, C, H, W, A, Gpad, Lo_pad):
    P = W + 2
    kernel = functools.partial(_rpn_fused_kernel, C, H, W, A, P, Lo_pad)
    flops = bs * (2 * C * (9 * C) * Lo_pad + 2 * (5 * A) * C * Lo_pad
                  + 20 * A * Lo_pad)
    transcendentals = bs * 3 * A * Lo_pad
    bytes_accessed = (bs * C * Gpad * 2            # bf16 feature map
                      + bs * 5 * A * Lo_pad * 4    # f32 proposal rows
                      + (2 + 2 * A) * Lo_pad * 4   # aux coord/anchor planes
                      + 9 * C * C * 2 + C * 4 + 5 * A * C * 2 + 5 * A * 4)
    return pl.pallas_call(
        kernel,
        out_shape=jax.ShapeDtypeStruct((bs, 5 * A, Lo_pad), jnp.float32),
        grid=(bs,),
        in_specs=[
            pl.BlockSpec((1, C, Gpad), lambda b: (b, 0, 0)),        # padded fmap
            pl.BlockSpec((2 + 2 * A, Lo_pad), lambda b: (0, 0)),    # aux planes
            pl.BlockSpec((C, 9 * C), lambda b: (0, 0)),             # conv3x3 W
            pl.BlockSpec((C, 1), lambda b: (0, 0)),                 # conv3x3 b
            pl.BlockSpec((5 * A, C), lambda b: (0, 0)),             # fused head W
            pl.BlockSpec((5 * A, 1), lambda b: (0, 0)),             # fused head b
        ],
        out_specs=pl.BlockSpec((1, 5 * A, Lo_pad), lambda b: (b, 0, 0)),
        compiler_params=pltpu.CompilerParams(
            dimension_semantics=("parallel",),
            vmem_limit_bytes=_vmem_limit_bytes()),
        cost_estimate=pl.CostEstimate(
            flops=flops, transcendentals=transcendentals,
            bytes_accessed=bytes_accessed),
    )


# ----------------------------------------------------------------------------
# Host-side glue: NMS (sequential, data-dependent -> numpy)
# ----------------------------------------------------------------------------
def nms_numpy(boxes, scores, thresh):
    # boxes already sorted by descending score (matches torchvision.ops.nms)
    del scores
    n = boxes.shape[0]
    x1, y1, x2, y2 = boxes[:, 0], boxes[:, 1], boxes[:, 2], boxes[:, 3]
    areas = (x2 - x1) * (y2 - y1)
    suppressed = np.zeros(n, dtype=bool)
    keep = []
    for i in range(n):
        if suppressed[i]:
            continue
        keep.append(i)
        if i + 1 >= n:
            break
        xx1 = np.maximum(x1[i], x1[i + 1:])
        yy1 = np.maximum(y1[i], y1[i + 1:])
        xx2 = np.minimum(x2[i], x2[i + 1:])
        yy2 = np.minimum(y2[i], y2[i + 1:])
        inter = np.maximum(xx2 - xx1, 0.0) * np.maximum(yy2 - yy1, 0.0)
        iou = inter / (areas[i] + areas[i + 1:] - inter)
        suppressed[i + 1:] |= iou > thresh
    return np.asarray(keep, dtype=np.int64)


# ----------------------------------------------------------------------------
# Forward wrapper (matches RPN.forward with training=False)
# ----------------------------------------------------------------------------
def rpn_forward(x_nchw, params, base_anchors, backbone_stride=16,
                rpn_pre_nms_top_n=2000, rpn_post_nms_top_n=2000,
                rpn_nms_thresh=0.7):
    bs, C, H, W = (int(d) for d in x_nchw.shape)
    A = int(base_anchors.shape[0])
    P = W + 2
    Lo = H * P
    Lo_pad = _round_up(Lo, 128)                 # lane-dense flattened frame length
    Gp = (H + 2) * P
    Gpad = _round_up(2 * P + 2 + Lo_pad, 128)   # room for the (2,2) tap over Lo_pad
    n_per = H * W * A
    k = min(rpn_pre_nms_top_n, n_per)

    base = np.asarray(base_anchors, np.float32) / float(backbone_stride)
    aw_np = base[:, 0]
    ah_np = base[:, 1]

    # aux planes: row0 = frame col idx, row1 = frame row idx (exact ints),
    # rows 2..2+A-1 = anchor widths, rows 2+A..2+2A-1 = anchor heights.
    idx = np.arange(Lo)
    aux_np = np.zeros((2 + 2 * A, Lo_pad), np.float32)
    aux_np[0, :Lo] = (idx % P).astype(np.float32)
    aux_np[1, :Lo] = (idx // P).astype(np.float32)
    aux_np[2:2 + A, :] = aw_np[:, None]
    aux_np[2 + A:2 + 2 * A, :] = ah_np[:, None]
    aux = jnp.asarray(aux_np)

    fused = _build_fused_call(bs, C, H, W, A, Gpad, Lo_pad)

    @jax.jit
    def device_fn(x, aux_in, w3, b3, wc, bc, wr, br):
        # bf16 BEFORE padding: single zero-padded, row-flattened bf16 copy.
        x_pad = jnp.pad(x.astype(jnp.bfloat16), ((0, 0), (0, 0), (1, 1), (1, 1)))
        x_flat = x_pad.reshape(bs, C, Gp)
        x_flat = jnp.pad(x_flat, ((0, 0), (0, 0), (0, Gpad - Gp)))

        # One-time tiny weight re-layouts: conv W as (Cout, 9*Cin) rows; heads
        # fused + regrouped field-major [cls0|cls1|dx*aw|dy*ah|dw] (dh dropped).
        w3r = jnp.transpose(w3, (2, 0, 1)).reshape(C, 9 * C).astype(jnp.bfloat16)
        b3c = b3.reshape(C, 1)

        aw_c = jnp.asarray(aw_np).reshape(A, 1)
        ah_c = jnp.asarray(ah_np).reshape(A, 1)
        wcT = wc.T                                   # (2A, C), row = a*2 + c
        wrT = wr.T                                   # (4A, C), row = a*4 + j
        wcr = jnp.concatenate(
            [wcT[0::2, :], wcT[1::2, :],
             wrT[0::4, :] * aw_c, wrT[1::4, :] * ah_c, wrT[2::4, :]],
            axis=0).astype(jnp.bfloat16)             # (5A, C)
        bcA = bc.reshape(A, 2)
        brA = br.reshape(A, 4)
        bcr = jnp.concatenate(
            [bcA[:, 0], bcA[:, 1],
             brA[:, 0] * aw_c[:, 0], brA[:, 1] * ah_c[:, 0], brA[:, 2]],
            axis=0).reshape(5 * A, 1)

        out = fused(x_flat, aux_in, w3r, b3c, wcr, bcr)   # (bs, 5A, Lo_pad)

        # Drop lane padding + junk frame columns; reorder to the reference
        # proposal ordering n = (h*W + w)*A + a, fields (score, x1, y1, x2, y2).
        props = out[:, :, :Lo].reshape(bs, 5, A, H, P)[..., :W]
        props = jnp.transpose(props, (0, 3, 4, 2, 1)).reshape(bs, n_per, 5)

        top_scores, top_idx = jax.lax.top_k(props[:, :, 0], k)
        top_boxes = jnp.take_along_axis(props[:, :, 1:], top_idx[:, :, None],
                                        axis=1)
        return props, top_scores, top_boxes

    props, top_scores, top_boxes = device_fn(
        x_nchw, aux, params["w3"], params["b3"], params["wc"], params["bc"],
        params["wr"], params["br"])

    boxes_np = np.asarray(top_boxes)
    scores_np = np.asarray(top_scores)
    batch_proposals = []
    for b in range(bs):
        keep = nms_numpy(boxes_np[b], scores_np[b], rpn_nms_thresh)
        keep = keep[:min(rpn_post_nms_top_n, keep.shape[0])]
        kept = boxes_np[b][keep]
        xywh = np.stack([(kept[:, 0] + kept[:, 2]) / 2.0,     # xyxy -> xywh
                         (kept[:, 1] + kept[:, 3]) / 2.0,
                         kept[:, 2] - kept[:, 0],
                         kept[:, 3] - kept[:, 1]], axis=-1)
        batch_proposals.append(jnp.asarray(xywh, dtype=jnp.float32))
    # The reference module returns only `batch_proposals`; the pre-NMS decoded
    # proposals are returned too for testing.
    return batch_proposals, props


if __name__ == "__main__":
    key = jax.random.PRNGKey(0)
    bs, C, H, W = 2, 32, 16, 16
    base_anchors = jnp.array([[32.0, 32.0], [64.0, 32.0], [32.0, 64.0]],
                             dtype=jnp.float32)
    A = base_anchors.shape[0]
    stride = 16

    k_x, k_w3, k_wc, k_wr = jax.random.split(key, 4)
    x = jax.random.normal(k_x, (bs, C, H, W), dtype=jnp.float32)

    # Deterministic parameter init (normal std=0.01, zero bias), per module __init__.
    params = {
        "w3": jax.random.normal(k_w3, (9, C, C), jnp.float32) * 0.01,  # [ky*3+kx, Cin, Cout]
        "b3": jnp.zeros((1, C), jnp.float32),
        "wc": jax.random.normal(k_wc, (C, A * 2), jnp.float32) * 0.01,
        "bc": jnp.zeros((1, A * 2), jnp.float32),
        "wr": jax.random.normal(k_wr, (C, A * 4), jnp.float32) * 0.01,
        "br": jnp.zeros((1, A * 4), jnp.float32),
    }

    proposals, props = rpn_forward(x, params, base_anchors,
                                   backbone_stride=stride)

    # Plain-JAX reference of the full fused path (conv3x3+ReLU -> heads ->
    # softmax -> decode -> clamp), compared against the kernel's pre-NMS output.
    x_nhwc = jnp.transpose(x, (0, 2, 3, 1)).astype(jnp.bfloat16)
    w3_hwio = params["w3"].reshape(3, 3, C, C).astype(jnp.bfloat16)
    feat_ref = jax.nn.relu(
        jax.lax.conv_general_dilated(
            x_nhwc, w3_hwio, (1, 1), "SAME",
            dimension_numbers=("NHWC", "HWIO", "NHWC"),
            preferred_element_type=jnp.float32)
        + params["b3"].reshape(1, 1, 1, C))
    cls_ref = (jnp.einsum("bhwc,ck->bhwk", feat_ref, params["wc"])
               + params["bc"].reshape(1, 1, 1, -1)).reshape(bs, H, W, A, 2)
    reg_ref = (jnp.einsum("bhwc,ck->bhwk", feat_ref, params["wr"])
               + params["br"].reshape(1, 1, 1, -1)).reshape(bs, H, W, A, 4)
    score_ref = jax.nn.softmax(cls_ref, axis=-1)[..., 1]
    base = np.asarray(base_anchors, np.float32) / float(stride)
    ax = jnp.arange(W, dtype=jnp.float32)[None, None, :, None]
    ay = jnp.arange(H, dtype=jnp.float32)[None, :, None, None]
    aw = jnp.asarray(base[:, 0])[None, None, None, :]
    ah = jnp.asarray(base[:, 1])[None, None, None, :]
    xc = reg_ref[..., 0] * aw + ax
    yc = reg_ref[..., 1] * ah + ay
    bw = jnp.exp(reg_ref[..., 2]) * aw
    bh = jnp.exp(reg_ref[..., 2]) * ah          # reference bug reproduced
    x1 = jnp.clip(xc - bw / 2, 0.0, W - 1.0)
    y1 = jnp.clip(yc - bh / 2, 0.0, H - 1.0)
    x2 = jnp.clip(xc + bw / 2, 0.0, W - 1.0)
    y2 = jnp.clip(yc + bh / 2, 0.0, H - 1.0)
    props_ref = jnp.stack([score_ref, x1, y1, x2, y2],
                          axis=-1).reshape(bs, H * W * A, 5)

    np.testing.assert_allclose(np.asarray(props), np.asarray(props_ref),
                               rtol=5e-3, atol=5e-3)

    for p in proposals:
        jax.block_until_ready(p)
    jax.block_until_ready(props)
    print("KERNEL_OK")
</pallas_src>

<mosaic_0001>
module attributes {stable_mosaic.version = 11 : i64} {
  func.func private @main(%arg0: i32) attributes {dimension_semantics = [#tpu.dimension_semantics<core_parallel>], iteration_bounds = array<i64: 2>, tpu.core_type = #tpu.core_type<sc_scalar_subcore>, window_params = []} {
    return
  }
}

module attributes {stable_mosaic.version = 11 : i64} {
  func.func private @main(%arg0: i32) attributes {dimension_semantics = [#tpu.dimension_semantics<core_parallel>], iteration_bounds = array<i64: 2>, tpu.core_type = #tpu.core_type<sc_scalar_subcore>, window_params = []} {
    return
  }
}

module attributes {stable_mosaic.version = 11 : i64} {
  func.func @_rpn_fused_kernel(%arg0: i32, %arg1: memref<1x32x512xbf16, #tpu.memory_space<vmem>>, %arg2: memref<8x384xf32, #tpu.memory_space<vmem>>, %arg3: memref<32x288xbf16, #tpu.memory_space<vmem>>, %arg4: memref<32x1xf32, #tpu.memory_space<vmem>>, %arg5: memref<15x32xbf16, #tpu.memory_space<vmem>>, %arg6: memref<15x1xf32, #tpu.memory_space<vmem>>, %arg7: memref<1x15x384xf32, #tpu.memory_space<vmem>>) attributes {dimension_semantics = [#tpu.dimension_semantics<parallel>], iteration_bounds = array<i64: 2>, scalar_prefetch = 0 : i64, scratch_operands = 0 : i64, tpu.core_type = #tpu.core_type<tc>, window_params = [{transform_indices = @transform_0, window_bounds = array<i64: 1, 32, 512>}, {pipeline_mode = #tpu.pipeline_mode<synchronous>, transform_indices = @transform_1, window_bounds = array<i64: 8, 384>}, {pipeline_mode = #tpu.pipeline_mode<synchronous>, transform_indices = @transform_2, window_bounds = array<i64: 32, 288>}, {pipeline_mode = #tpu.pipeline_mode<synchronous>, transform_indices = @transform_3, window_bounds = array<i64: 32, 1>}, {pipeline_mode = #tpu.pipeline_mode<synchronous>, transform_indices = @transform_4, window_bounds = array<i64: 15, 32>}, {pipeline_mode = #tpu.pipeline_mode<synchronous>, transform_indices = @transform_5, window_bounds = array<i64: 15, 1>}, {transform_indices = @transform_6, window_bounds = array<i64: 1, 15, 384>}]} {
    %c0 = arith.constant 0 : index
    %c0_0 = arith.constant 0 : index
    %c0_1 = arith.constant 0 : index
    %0 = vector.load %arg1[%c0, %c0_0, %c0_1] : memref<1x32x512xbf16, #tpu.memory_space<vmem>>, vector<1x32x512xbf16>
    %1 = vector.shape_cast %0 : vector<1x32x512xbf16> to vector<32x512xbf16>
    %2 = vector.extract_strided_slice %1 {offsets = [0, 0], sizes = [32, 384], strides = [1, 1]} : vector<32x512xbf16> to vector<32x384xbf16>
    %3 = vector.extract_strided_slice %1 {offsets = [0, 1], sizes = [32, 384], strides = [1, 1]} : vector<32x512xbf16> to vector<32x384xbf16>
    %4 = vector.extract_strided_slice %1 {offsets = [0, 2], sizes = [32, 384], strides = [1, 1]} : vector<32x512xbf16> to vector<32x384xbf16>
    %5 = vector.extract_strided_slice %1 {offsets = [0, 18], sizes = [32, 384], strides = [1, 1]} : vector<32x512xbf16> to vector<32x384xbf16>
    %6 = vector.extract_strided_slice %1 {offsets = [0, 19], sizes = [32, 384], strides = [1, 1]} : vector<32x512xbf16> to vector<32x384xbf16>
    %7 = vector.extract_strided_slice %1 {offsets = [0, 20], sizes = [32, 384], strides = [1, 1]} : vector<32x512xbf16> to vector<32x384xbf16>
    %8 = vector.extract_strided_slice %1 {offsets = [0, 36], sizes = [32, 384], strides = [1, 1]} : vector<32x512xbf16> to vector<32x384xbf16>
    %9 = vector.extract_strided_slice %1 {offsets = [0, 37], sizes = [32, 384], strides = [1, 1]} : vector<32x512xbf16> to vector<32x384xbf16>
    %10 = vector.extract_strided_slice %1 {offsets = [0, 38], sizes = [32, 384], strides = [1, 1]} : vector<32x512xbf16> to vector<32x384xbf16>
    %11 = tpu.concatenate %2, %3, %4, %5, %6, %7, %8, %9, %10 in 0 : vector<32x384xbf16>, vector<32x384xbf16>, vector<32x384xbf16>, vector<32x384xbf16>, vector<32x384xbf16>, vector<32x384xbf16>, vector<32x384xbf16>, vector<32x384xbf16>, vector<32x384xbf16> -> vector<288x384xbf16>
    %c0_2 = arith.constant 0 : index
    %c0_3 = arith.constant 0 : index
    %12 = vector.load %arg3[%c0_2, %c0_3] : memref<32x288xbf16, #tpu.memory_space<vmem>>, vector<32x288xbf16>
    %cst = arith.constant dense<0.000000e+00> : vector<32x384xf32>
    %13 = tpu.matmul %12, %11, %cst {dimension_numbers = #tpu.dot_dimension_numbers<[1], [0], [0], [1], [0, 0, 1, 1], [], []>} : vector<32x288xbf16>, vector<288x384xbf16>, vector<32x384xf32> -> vector<32x384xf32>
    %c0_4 = arith.constant 0 : index
    %c0_5 = arith.constant 0 : index
    %14 = vector.load %arg4[%c0_4, %c0_5] : memref<32x1xf32, #tpu.memory_space<vmem>>, vector<32x1xf32>
    %15 = vector.broadcast %14 : vector<32x1xf32> to vector<32x384xf32>
    %16 = arith.addf %13, %15 : vector<32x384xf32>
    %cst_6 = arith.constant 0.000000e+00 : f32
    %17 = vector.broadcast %cst_6 : f32 to vector<32x384xf32>
    %18 = arith.maximumf %16, %17 : vector<32x384xf32>
    %c0_7 = arith.constant 0 : index
    %c0_8 = arith.constant 0 : index
    %19 = vector.load %arg5[%c0_7, %c0_8] : memref<15x32xbf16, #tpu.memory_space<vmem>>, vector<15x32xbf16>
    %20 = arith.truncf %18 : vector<32x384xf32> to vector<32x384xbf16>
    %cst_9 = arith.constant dense<0.000000e+00> : vector<15x384xf32>
    %21 = tpu.matmul %19, %20, %cst_9 {dimension_numbers = #tpu.dot_dimension_numbers<[1], [0], [0], [1], [0, 0, 1, 1], [], []>} : vector<15x32xbf16>, vector<32x384xbf16>, vector<15x384xf32> -> vector<15x384xf32>
    %c0_10 = arith.constant 0 : index
    %c0_11 = arith.constant 0 : index
    %22 = vector.load %arg6[%c0_10, %c0_11] : memref<15x1xf32, #tpu.memory_space<vmem>>, vector<15x1xf32>
    %23 = vector.broadcast %22 : vector<15x1xf32> to vector<15x384xf32>
    %24 = arith.addf %21, %23 : vector<15x384xf32>
    %25 = vector.extract_strided_slice %24 {offsets = [0, 0], sizes = [3, 384], strides = [1, 1]} : vector<15x384xf32> to vector<3x384xf32>
    %26 = vector.extract_strided_slice %24 {offsets = [3, 0], sizes = [3, 384], strides = [1, 1]} : vector<15x384xf32> to vector<3x384xf32>
    %27 = vector.extract_strided_slice %24 {offsets = [6, 0], sizes = [3, 384], strides = [1, 1]} : vector<15x384xf32> to vector<3x384xf32>
    %28 = vector.extract_strided_slice %24 {offsets = [9, 0], sizes = [3, 384], strides = [1, 1]} : vector<15x384xf32> to vector<3x384xf32>
    %29 = vector.extract_strided_slice %24 {offsets = [12, 0], sizes = [3, 384], strides = [1, 1]} : vector<15x384xf32> to vector<3x384xf32>
    %c0_12 = arith.constant 0 : index
    %c0_13 = arith.constant 0 : index
    %30 = vector.load %arg2[%c0_12, %c0_13] : memref<8x384xf32, #tpu.memory_space<vmem>>, vector<1x384xf32>
    %c1 = arith.constant 1 : index
    %c0_14 = arith.constant 0 : index
    %31 = vector.load %arg2[%c1, %c0_14] : memref<8x384xf32, #tpu.memory_space<vmem>>, vector<1x384xf32>
    %c2 = arith.constant 2 : index
    %c0_15 = arith.constant 0 : index
    %32 = vector.load %arg2[%c2, %c0_15] : memref<8x384xf32, #tpu.memory_space<vmem>>, vector<3x384xf32>
    %c5 = arith.constant 5 : index
    %c0_16 = arith.constant 0 : index
    %33 = vector.load %arg2[%c5, %c0_16] : memref<8x384xf32, #tpu.memory_space<vmem>>, vector<3x384xf32>
    %34 = arith.subf %25, %26 : vector<3x384xf32>
    %35 = math.exp %34 : vector<3x384xf32>
    %cst_17 = arith.constant 1.000000e+00 : f32
    %36 = vector.broadcast %cst_17 : f32 to vector<3x384xf32>
    %37 = arith.addf %36, %35 : vector<3x384xf32>
    %38 = tpu.reciprocal %37 {approx = true} : vector<3x384xf32> -> vector<3x384xf32>
    %39 = vector.broadcast %30 : vector<1x384xf32> to vector<3x384xf32>
    %40 = arith.addf %27, %39 : vector<3x384xf32>
    %41 = vector.broadcast %31 : vector<1x384xf32> to vector<3x384xf32>
    %42 = arith.addf %28, %41 : vector<3x384xf32>
    %43 = math.exp %29 : vector<3x384xf32>
    %44 = arith.mulf %43, %32 : vector<3x384xf32>
    %45 = arith.mulf %43, %33 : vector<3x384xf32>
    %cst_18 = arith.constant 5.000000e-01 : f32
    %46 = vector.broadcast %cst_18 : f32 to vector<3x384xf32>
    %47 = arith.mulf %46, %44 : vector<3x384xf32>
    %48 = arith.subf %40, %47 : vector<3x384xf32>
    %cst_19 = arith.constant 0.000000e+00 : f32
    %cst_20 = arith.constant 1.500000e+01 : f32
    %49 = vector.broadcast %cst_19 : f32 to vector<3x384xf32>
    %50 = arith.maximumf %49, %48 : vector<3x384xf32>
    %51 = vector.broadcast %cst_20 : f32 to vector<3x384xf32>
    %52 = arith.minimumf %51, %50 : vector<3x384xf32>
    %cst_21 = arith.constant 5.000000e-01 : f32
    %53 = vector.broadcast %cst_21 : f32 to vector<3x384xf32>
    %54 = arith.mulf %53, %45 : vector<3x384xf32>
    %55 = arith.subf %42, %54 : vector<3x384xf32>
    %cst_22 = arith.constant 0.000000e+00 : f32
    %cst_23 = arith.constant 1.500000e+01 : f32
    %56 = vector.broadcast %cst_22 : f32 to vector<3x384xf32>
    %57 = arith.maximumf %56, %55 : vector<3x384xf32>
    %58 = vector.broadcast %cst_23 : f32 to vector<3x384xf32>
    %59 = arith.minimumf %58, %57 : vector<3x384xf32>
    %cst_24 = arith.constant 5.000000e-01 : f32
    %60 = vector.broadcast %cst_24 : f32 to vector<3x384xf32>
    %61 = arith.mulf %60, %44 : vector<3x384xf32>
    %62 = arith.addf %40, %61 : vector<3x384xf32>
    %cst_25 = arith.constant 0.000000e+00 : f32
    %cst_26 = arith.constant 1.500000e+01 : f32
    %63 = vector.broadcast %cst_25 : f32 to vector<3x384xf32>
    %64 = arith.maximumf %63, %62 : vector<3x384xf32>
    %65 = vector.broadcast %cst_26 : f32 to vector<3x384xf32>
    %66 = arith.minimumf %65, %64 : vector<3x384xf32>
    %cst_27 = arith.constant 5.000000e-01 : f32
    %67 = vector.broadcast %cst_27 : f32 to vector<3x384xf32>
    %68 = arith.mulf %67, %45 : vector<3x384xf32>
    %69 = arith.addf %42, %68 : vector<3x384xf32>
    %cst_28 = arith.constant 0.000000e+00 : f32
    %cst_29 = arith.constant 1.500000e+01 : f32
    %70 = vector.broadcast %cst_28 : f32 to vector<3x384xf32>
    %71 = arith.maximumf %70, %69 : vector<3x384xf32>
    %72 = vector.broadcast %cst_29 : f32 to vector<3x384xf32>
    %73 = arith.minimumf %72, %71 : vector<3x384xf32>
    %c0_30 = arith.constant 0 : index
    %c0_31 = arith.constant 0 : index
    %c0_32 = arith.constant 0 : index
    %74 = vector.load %arg7[%c0_30, %c0_31, %c0_32] : memref<1x15x384xf32, #tpu.memory_space<vmem>>, vector<1x3x384xf32>
    %75 = vector.shape_cast %74 : vector<1x3x384xf32> to vector<3x384xf32>
    %76 = vector.shape_cast %38 : vector<3x384xf32> to vector<1x3x384xf32>
    tpu.vector_store %arg7[%c0_30, %c0_31, %c0_32], %76 {strides = array<i32>} : memref<1x15x384xf32, #tpu.memory_space<vmem>>, vector<1x3x384xf32>,
    %c0_33 = arith.constant 0 : index
    %c3 = arith.constant 3 : index
    %c0_34 = arith.constant 0 : index
    %77 = vector.load %arg7[%c0_33, %c3, %c0_34] : memref<1x15x384xf32, #tpu.memory_space<vmem>>, vector<1x3x384xf32>
    %78 = vector.shape_cast %77 : vector<1x3x384xf32> to vector<3x384xf32>
    %79 = vector.shape_cast %52 : vector<3x384xf32> to vector<1x3x384xf32>
    tpu.vector_store %arg7[%c0_33, %c3, %c0_34], %79 {strides = array<i32>} : memref<1x15x384xf32, #tpu.memory_space<vmem>>, vector<1x3x384xf32>,
    %c0_35 = arith.constant 0 : index
    %c6 = arith.constant 6 : index
    %c0_36 = arith.constant 0 : index
    %80 = vector.load %arg7[%c0_35, %c6, %c0_36] : memref<1x15x384xf32, #tpu.memory_space<vmem>>, vector<1x3x384xf32>
    %81 = vector.shape_cast %80 : vector<1x3x384xf32> to vector<3x384xf32>
    %82 = vector.shape_cast %59 : vector<3x384xf32> to vector<1x3x384xf32>
    tpu.vector_store %arg7[%c0_35, %c6, %c0_36], %82 {strides = array<i32>} : memref<1x15x384xf32, #tpu.memory_space<vmem>>, vector<1x3x384xf32>,
    %c0_37 = arith.constant 0 : index
    %c9 = arith.constant 9 : index
    %c0_38 = arith.constant 0 : index
    %83 = vector.load %arg7[%c0_37, %c9, %c0_38] : memref<1x15x384xf32, #tpu.memory_space<vmem>>, vector<1x3x384xf32>
    %84 = vector.shape_cast %83 : vector<1x3x384xf32> to vector<3x384xf32>
    %85 = vector.shape_cast %66 : vector<3x384xf32> to vector<1x3x384xf32>
    tpu.vector_store %arg7[%c0_37, %c9, %c0_38], %85 {strides = array<i32>} : memref<1x15x384xf32, #tpu.memory_space<vmem>>, vector<1x3x384xf32>,
    %c0_39 = arith.constant 0 : index
    %c12 = arith.constant 12 : index
    %c0_40 = arith.constant 0 : index
    %86 = vector.load %arg7[%c0_39, %c12, %c0_40] : memref<1x15x384xf32, #tpu.memory_space<vmem>>, vector<1x3x384xf32>
    %87 = vector.shape_cast %86 : vector<1x3x384xf32> to vector<3x384xf32>
    %88 = vector.shape_cast %73 : vector<3x384xf32> to vector<1x3x384xf32>
    tpu.vector_store %arg7[%c0_39, %c12, %c0_40], %88 {strides = array<i32>} : memref<1x15x384xf32, #tpu.memory_space<vmem>>, vector<1x3x384xf32>,
    return
  }
  func.func @transform_0(%arg0: i32) -> (i32, i32, i32) {
    %c0_i32 = arith.constant 0 : i32
    %c0_i32_0 = arith.constant 0 : i32
    %c0_i32_1 = arith.constant 0 : i32
    return %arg0, %c0_i32, %c0_i32_0 : i32, i32, i32
  }
  func.func @transform_1(%arg0: i32) -> (i32, i32) {
    %c0_i32 = arith.constant 0 : i32
    %c0_i32_0 = arith.constant 0 : i32
    %c0_i32_1 = arith.constant 0 : i32
    return %c0_i32, %c0_i32_0 : i32, i32
  }
  func.func @transform_2(%arg0: i32) -> (i32, i32) {
    %c0_i32 = arith.constant 0 : i32
    %c0_i32_0 = arith.constant 0 : i32
    %c0_i32_1 = arith.constant 0 : i32
    return %c0_i32, %c0_i32_0 : i32, i32
  }
  func.func @transform_3(%arg0: i32) -> (i32, i32) {
    %c0_i32 = arith.constant 0 : i32
    %c0_i32_0 = arith.constant 0 : i32
    %c0_i32_1 = arith.constant 0 : i32
    return %c0_i32, %c0_i32_0 : i32, i32
  }
  func.func @transform_4(%arg0: i32) -> (i32, i32) {
    %c0_i32 = arith.constant 0 : i32
    %c0_i32_0 = arith.constant 0 : i32
    %c0_i32_1 = arith.constant 0 : i32
    return %c0_i32, %c0_i32_0 : i32, i32
  }
  func.func @transform_5(%arg0: i32) -> (i32, i32) {
    %c0_i32 = arith.constant 0 : i32
    %c0_i32_0 = arith.constant 0 : i32
    %c0_i32_1 = arith.constant 0 : i32
    return %c0_i32, %c0_i32_0 : i32, i32
  }
  func.func @transform_6(%arg0: i32) -> (i32, i32, i32) {
    %c0_i32 = arith.constant 0 : i32
    %c0_i32_0 = arith.constant 0 : i32
    %c0_i32_1 = arith.constant 0 : i32
    return %arg0, %c0_i32, %c0_i32_0 : i32, i32, i32
  }
}

</mosaic_0001>

<llo_original>
// kernel: device_fn.1
$region0: #{device_fn.1}
  #allocation0 [shape = 'u32[]', space=smem, size = 0x4, offset = 0x4, fixed_abs, tag = 'smem constant byte address 0x4 - core index']
  #allocation1 [shape = 'u32[144,128]{1,0:T(1,128)}', space=vmem, size = 0x12000, scoped, tag = 'internal scratch']
  %s0 = inlined_call_operand.vmem [shape: bf16[2,32,512], index: 0, kind: input, shape index: {}]
  %s1 = inlined_call_operand.vmem [shape: f32[8,384], index: 1, kind: input, shape index: {}]
  %s2 = inlined_call_operand.vmem [shape: bf16[32,288], index: 2, kind: input, shape index: {}]
  %s3 = inlined_call_operand.vmem [shape: f32[32,1], index: 3, kind: input, shape index: {}]
  %s4 = inlined_call_operand.vmem [shape: bf16[15,32], index: 4, kind: input, shape index: {}]
  %s5 = inlined_call_operand.vmem [shape: f32[15,1], index: 5, kind: input, shape index: {}]
  %s6 = inlined_call_operand.vmem [shape: f32[2,15,384], index: 6, kind: output, shape index: {}]
  %s7 = sld [smem:[#allocation0]]
  $region57: #{device_fn.1} parent=0
    _
  %s9 = ssub.s32 1, %s7
  %s10 = scalar_select 0, %s9, %s7
  loop: start=0, step=1, limit=4
  $region2: #{device_fn.1} parent=0 // loop_pre_header
    _
  $region3: #{device_fn.1} parent=0 // loop_header
    %s12 = sphi 0, %s16
    %p13 = scmp.ge.s32.totalorder %s12, 4
    %s22 = sphi 0, %s24
    %s25 = sphi 0, %s22
    %s26 = sphi 0, %s25
    %s42 = sphi 0, %s26
    %s46 = sphi 0, %s46
    %s48 = sphi 0, %s46
    %s49 = sphi 0, %s48
    %s63 = sphi 0, %s49
    %s67 = sphi 0, %s67
    %s69 = sphi 0, %s67
    %s70 = sphi 0, %s69
    %s84 = sphi 0, %s70
    %s88 = sphi 0, %s88
    %s90 = sphi 0, %s88
    %s91 = sphi 0, %s90
    %s105 = sphi 0, %s91
    %s109 = sphi 0, %s109
    %s111 = sphi 0, %s109
    %s112 = sphi 0, %s111
    %s126 = sphi 0, %s112
    %s130 = sphi 0, %s130
    %s132 = sphi 0, %s130
    %s133 = sphi 0, %s132
    %s147 = sphi 0, %s133
    %s153 = sphi 0, %s155
    %s156 = sphi 0, %s153
    %s157 = sphi 0, %s156
    %s173 = sphi 0, %s157
  $region4: #{device_fn.1} parent=0 // loop_header_branch
    %15 = sbr.rel (%p13) target = $region8
  $region5: #{device_fn.1} parent=0 // loop_body
    %s17 = ssub.s32 %s12, 1
    %s18 = ssub.s32 %s12, 2
    %s19 = sadd.s32 %s12, 1
    %s20 = ssub.s32 %s12, %s19
    %p21 = scmp.eq.s32.totalorder %s20, 0
    %s23 = sadd.s32 %s22, 1
    %s24 = scalar_select %p21, %s22, %s23
    %p27 = pneg %p21
    %p28 = scmp.eq.s32.totalorder %s12, 1
    %p29 = por %p27, %p28
    %p30 = scmp.ne.s32.totalorder %s22, %s25
    %p31 = scmp.eq.s32.totalorder %s12, 0
    %p32 = por %p30, %p31
    %p33 = scmp.ne.s32.totalorder %s22, %s25
    %p34 = scmp.eq.s32.totalorder %s17, 1
    %p35 = por %p33, %p34
    %p36 = scmp.ne.s32.totalorder %s25, %s26
    %p37 = scmp.eq.s32.totalorder %s17, 0
    %p38 = por %p36, %p37
    %p39 = scmp.ne.s32.totalorder %s25, %s26
    %p40 = scmp.eq.s32.totalorder %s18, 1
    %p41 = por %p39, %p40
    %p43 = scmp.ne.s32.totalorder %s26, %s42
    %p44 = scmp.eq.s32.totalorder %s18, 0
    %p45 = por %p43, %p44
    %s47 = sadd.s32 %s46, 1
    %p50 = scmp.eq.s32.totalorder %s12, 1
    %p51 = scmp.ne.s32.totalorder %s46, %s48
    %p52 = scmp.eq.s32.totalorder %s12, 0
    %p53 = por %p51, %p52
    %p54 = scmp.ne.s32.totalorder %s46, %s48
    %p55 = scmp.eq.s32.totalorder %s17, 1
    %p56 = por %p54, %p55
    %p57 = scmp.ne.s32.totalorder %s48, %s49
    %p58 = scmp.eq.s32.totalorder %s17, 0
    %p59 = por %p57, %p58
    %p60 = scmp.ne.s32.totalorder %s48, %s49
    %p61 = scmp.eq.s32.totalorder %s18, 1
    %p62 = por %p60, %p61
    %p64 = scmp.ne.s32.totalorder %s49, %s63
    %p65 = scmp.eq.s32.totalorder %s18, 0
    %p66 = por %p64, %p65
    %s68 = sadd.s32 %s67, 1
    %p71 = scmp.eq.s32.totalorder %s12, 1
    %p72 = scmp.ne.s32.totalorder %s67, %s69
    %p73 = scmp.eq.s32.totalorder %s12, 0
    %p74 = por %p72, %p73
    %p75 = scmp.ne.s32.totalorder %s67, %s69
    %p76 = scmp.eq.s32.totalorder %s17, 1
    %p77 = por %p75, %p76
    %p78 = scmp.ne.s32.totalorder %s69, %s70
    %p79 = scmp.eq.s32.totalorder %s17, 0
    %p80 = por %p78, %p79
    %p81 = scmp.ne.s32.totalorder %s69, %s70
    %p82 = scmp.eq.s32.totalorder %s18, 1
    %p83 = por %p81, %p82
    %p85 = scmp.ne.s32.totalorder %s70, %s84
    %p86 = scmp.eq.s32.totalorder %s18, 0
    %p87 = por %p85, %p86
    %s89 = sadd.s32 %s88, 1
    %p92 = scmp.eq.s32.totalorder %s12, 1
    %p93 = scmp.ne.s32.totalorder %s88, %s90
    %p94 = scmp.eq.s32.totalorder %s12, 0
    %p95 = por %p93, %p94
    %p96 = scmp.ne.s32.totalorder %s88, %s90
    %p97 = scmp.eq.s32.totalorder %s17, 1
    %p98 = por %p96, %p97
    %p99 = scmp.ne.s32.totalorder %s90, %s91
    %p100 = scmp.eq.s32.totalorder %s17, 0
    %p101 = por %p99, %p100
    %p102 = scmp.ne.s32.totalorder %s90, %s91
    %p103 = scmp.eq.s32.totalorder %s18, 1
    %p104 = por %p102, %p103
    %p106 = scmp.ne.s32.totalorder %s91, %s105
    %p107 = scmp.eq.s32.totalorder %s18, 0
    %p108 = por %p106, %p107
    %s110 = sadd.s32 %s109, 1
    %p113 = scmp.eq.s32.totalorder %s12, 1
    %p114 = scmp.ne.s32.totalorder %s109, %s111
    %p115 = scmp.eq.s32.totalorder %s12, 0
    %p116 = por %p114, %p115
    %p117 = scmp.ne.s32.totalorder %s109, %s111
    %p118 = scmp.eq.s32.totalorder %s17, 1
    %p119 = por %p117, %p118
    %p120 = scmp.ne.s32.totalorder %s111, %s112
    %p121 = scmp.eq.s32.totalorder %s17, 0
    %p122 = por %p120, %p121
    %p123 = scmp.ne.s32.totalorder %s111, %s112
    %p124 = scmp.eq.s32.totalorder %s18, 1
    %p125 = por %p123, %p124
    %p127 = scmp.ne.s32.totalorder %s112, %s126
    %p128 = scmp.eq.s32.totalorder %s18, 0
    %p129 = por %p127, %p128
    %s131 = sadd.s32 %s130, 1
    %p134 = scmp.eq.s32.totalorder %s12, 1
    %p135 = scmp.ne.s32.totalorder %s130, %s132
    %p136 = scmp.eq.s32.totalorder %s12, 0
    %p137 = por %p135, %p136
    %p138 = scmp.ne.s32.totalorder %s130, %s132
    %p139 = scmp.eq.s32.totalorder %s17, 1
    %p140 = por %p138, %p139
    %p141 = scmp.ne.s32.totalorder %s132, %s133
    %p142 = scmp.eq.s32.totalorder %s17, 0
    %p143 = por %p141, %p142
    %p144 = scmp.ne.s32.totalorder %s132, %s133
    %p145 = scmp.eq.s32.totalorder %s18, 1
    %p146 = por %p144, %p145
    %p148 = scmp.ne.s32.totalorder %s133, %s147
    %p149 = scmp.eq.s32.totalorder %s18, 0
    %p150 = por %p148, %p149
    %s151 = ssub.s32 %s12, %s19
    %p152 = scmp.eq.s32.totalorder %s151, 0
    %s154 = sadd.s32 %s153, 1
    %s155 = scalar_select %p152, %s153, %s154
    %p158 = pneg %p152
    %p159 = scmp.eq.s32.totalorder %s12, 1
    %p160 = por %p158, %p159
    %p161 = scmp.ne.s32.totalorder %s153, %s156
    %p162 = scmp.eq.s32.totalorder %s12, 0
    %p163 = por %p161, %p162
    %p164 = scmp.ne.s32.totalorder %s153, %s156
    %p165 = scmp.eq.s32.totalorder %s17, 1
    %p166 = por %p164, %p165
    %p167 = scmp.ne.s32.totalorder %s156, %s157
    %p168 = scmp.eq.s32.totalorder %s17, 0
    %p169 = por %p167, %p168
    %p170 = scmp.ne.s32.totalorder %s156, %s157
    %p171 = scmp.eq.s32.totalorder %s18, 1
    %p172 = por %p170, %p171
    %p174 = scmp.ne.s32.totalorder %s157, %s173
    %p175 = scmp.eq.s32.totalorder %s18, 0
    %p176 = por %p174, %p175
    %p177 = scmp.le.s32.totalorder 1, %s12
    %p178 = scmp.lt.s32.totalorder %s12, 3
    %p179 = pnand %p177, %p178
    %p180 = pneg %p179
    // Predicated region
    $region9: #{device_fn.1} parent=5 // pred_check
      _
    $region10: #{device_fn.1} parent=5 // pred_check_branch
      %182 = sbr.rel (%p179) target = $region12
    $region11: #{device_fn.1} parent=5 // pred_region
      %s183 = ssub.s32 %s12, 1
      // Predicated region
      $region13: #{device_fn.1} parent=11 // pred_check
        %p184 = pneg %p59
      $region14: #{device_fn.1} parent=11 // pred_check_branch
        %186 = sbr.rel (%p184) target = $region16
      $region15: #{device_fn.1} parent=11 // pred_region
        _
      $region16: #{device_fn.1} parent=11 // pred_fallthru
        _
      // Predicated region
      $region17: #{device_fn.1} parent=11 // pred_check
        %p187 = pneg %p80
      $region18: #{device_fn.1} parent=11 // pred_check_branch
        %189 = sbr.rel (%p187) target = $region20
      $region19: #{device_fn.1} parent=11 // pred_region
        _
      $region20: #{device_fn.1} parent=11 // pred_fallthru
        _
      // Predicated region
      $region21: #{device_fn.1} parent=11 // pred_check
        %p190 = pneg %p101
      $region22: #{device_fn.1} parent=11 // pred_check_branch
        %192 = sbr.rel (%p190) target = $region24
      $region23: #{device_fn.1} parent=11 // pred_region
        _
      $region24: #{device_fn.1} parent=11 // pred_fallthru
        _
      // Predicated region
      $region25: #{device_fn.1} parent=11 // pred_check
        %p193 = pneg %p122
      $region26: #{device_fn.1} parent=11 // pred_check_branch
        %195 = sbr.rel (%p193) target = $region28
      $region27: #{device_fn.1} parent=11 // pred_region
        _
      $region28: #{device_fn.1} parent=11 // pred_fallthru
        _
      // Predicated region
      $region29: #{device_fn.1} parent=11 // pred_check
        %p196 = pneg %p143
      $region30: #{device_fn.1} parent=11 // pred_check_branch
        %198 = sbr.rel (%p196) target = $region32
      $region31: #{device_fn.1} parent=11 // pred_region
        _
      $region32: #{device_fn.1} parent=11 // pred_fallthru
        _
    $region12: #{device_fn.1} parent=5 // pred_fallthru
      _
    %p199 = scmp.lt.s32.totalorder %s12, 2
    // Predicated region
    $region33: #{device_fn.1} parent=5 // pred_check
      %p200 = pneg %p199
    $region34: #{device_fn.1} parent=5 // pred_check_branch
      %202 = sbr.rel (%p200) target = $region36
    $region35: #{device_fn.1} parent=5 // pred_region
      // Predicated region
      $region37: #{device_fn.1} parent=35 // pred_check
        %p203 = pneg %p32
      $region38: #{device_fn.1} parent=35 // pred_check_branch
        %205 = sbr.rel (%p203) target = $region40
      $region39: #{device_fn.1} parent=35 // pred_region
        %p206 = scmp.lt.s32.totalorder %s12, 1
        %s207 = scalar_select %p206, %s12, 1
        %s208 = smul.addr %s207, 16
        %s209 = smul.addr %s208, 4
        %s210 = scalar_lea.vmem %s0, %s209
      $region40: #{device_fn.1} parent=35 // pred_fallthru
        _
    $region36: #{device_fn.1} parent=5 // pred_fallthru
      _
    %p211 = scmp.le.s32.totalorder 1, %s12
    %p212 = scmp.lt.s32.totalorder %s12, 3
    %p213 = pnand %p211, %p212
    %p214 = pneg %p213
    // Predicated region
    $region41: #{device_fn.1} parent=5 // pred_check
      _
    $region42: #{device_fn.1} parent=5 // pred_check_branch
      %216 = sbr.rel (%p213) target = $region44
    $region43: #{device_fn.1} parent=5 // pred_region
      %s217 = ssub.s32 %s12, 1
      %p218 = scmp.lt.s32.totalorder %s17, 1
      %s219 = scalar_select %p218, %s17, 1
      %s220 = smul.addr %s219, 16
      %s221 = smul.addr %s220, 4
      %s222 = scalar_lea.vmem %s0, %s221
      %p223 = pneg %p38
      %p224 = pneg %p35
      %p225 = pneg %p59
      %p226 = pneg %p56
      %p227 = pneg %p80
      %p228 = pneg %p77
      %p229 = pneg %p101
      %p230 = pneg %p98
      %p231 = pneg %p122
      %p232 = pneg %p119
      %p233 = pneg %p143
      %p234 = pneg %p140
      %p235 = pneg %p169
      %p236 = pneg %p166
      %p237 = scmp.lt.s32.totalorder %s17, 1
      %s238 = scalar_select %p237, %s17, 1
      %s239 = smul.addr %s238, 6
      %s240 = smul.addr %s239, 8
      %s241 = scalar_lea.vmem %s6, %s240
      %p242 = scmp.lt.s32.totalorder %s17, 1
      %s243 = scalar_select %p242, %s17, 1
      %s244 = smul.addr %s243, 16
      %s245 = smul.addr %s244, 4
      %s246 = scalar_lea.vmem %s0, %s245
      %p247 = scmp.lt.s32.totalorder %s17, 1
      %s248 = scalar_select %p247, %s17, 1
      %s249 = smul.addr %s248, 6
      %s250 = smul.addr %s249, 8
      %s251 = scalar_lea.vmem %s6, %s250
      %v253 = vld [vmem:[%s246] sm:$0xff]
      %v254 = vld [vmem:[%s246 + $0x8] sm:$0xff]
      %v255 = vld [vmem:[%s246 + $0x10] sm:$0xff]
      %v256 = vld [vmem:[%s246 + $0x18] sm:$0xff]
      %v257 = vld [vmem:[%s246 + $0x20] sm:$0xff]
      %v258 = vld [vmem:[%s246 + $0x28] sm:$0xff]
      %v259 = vld [vmem:[%s246 + $0x30] sm:$0xff]
      %v260 = vld [vmem:[%s246 + $0x38] sm:$0xff]
      %v269 = vunpack.c.l.b16 %v253
      %v270 = vunpack.c.h.b16 %v253
      %v271 = vunpack.c.l.b16 %v254
      %v272 = vunpack.c.l.b16 %v255
      %v273 = vunpack.c.h.b16 %v255
      %v274 = vunpack.c.l.b16 %v256
      %v275 = vunpack.c.l.b16 %v257
      %v276 = vunpack.c.h.b16 %v257
      %v277 = vunpack.c.l.b16 %v258
      %v278 = vunpack.c.l.b16 %v259
      %v279 = vunpack.c.h.b16 %v259
      %v280 = vunpack.c.l.b16 %v260
      %v281 = vpack.c.b16 %v272, %v269
      %v282 = vpack.c.b16 %v273, %v270
      %v283 = vpack.c.b16 %v274, %v271
      %v284 = vpack.c.b16 %v278, %v275
      %v285 = vpack.c.b16 %v279, %v276
      %v286 = vpack.c.b16 %v280, %v277
      %v293 = vunpack.c.h.b16 %v254
      %v294 = vunpack.c.h.b16 %v256
      %v295 = vunpack.c.h.b16 %v258
      %v296 = vunpack.c.h.b16 %v260
      %v297 = vpack.c.b16 %v294, %v293
      %v298 = vpack.c.b16 %v296, %v295
      %299 = vrot.lane.b32.xlu0 %v281, 127
      %v300 = vpop.permute.xlu0 %299
      %301 = vrot.lane.b32.xlu0 %v282, 127
      %v302 = vpop.permute.xlu0 %301
      %303 = vrot.lane.b32.xlu0 %v283, 127
      %v304 = vpop.permute.xlu0 %303
      %305 = vrot.lane.b32.xlu0 %v297, 127
      %v306 = vpop.permute.xlu0 %305
      %307 = vrot.lane.b32.xlu0 %v284, 127
      %v308 = vpop.permute.xlu0 %307
      %309 = vrot.lane.b32.xlu0 %v285, 127
      %v310 = vpop.permute.xlu0 %309
      %311 = vrot.lane.b32.xlu0 %v286, 127
      %v312 = vpop.permute.xlu0 %311
      %313 = vrot.lane.b32.xlu0 %v298, 127
      %v314 = vpop.permute.xlu0 %313
      %vm315 = vcmask 1039360
      %v316 = vsel %vm315, %v300, %v302
      %v317 = vsel %vm315, %v302, %v304
      %v318 = vsel %vm315, %v304, %v306
      %v319 = vsel %vm315, %v308, %v310
      %v320 = vsel %vm315, %v310, %v312
      %v321 = vsel %vm315, %v312, %v314
      %328 = vrot.lane.b32.xlu0 %v281, 126
      %v329 = vpop.permute.xlu0 %328
      %330 = vrot.lane.b32.xlu0 %v282, 126
      %v331 = vpop.permute.xlu0 %330
      %332 = vrot.lane.b32.xlu0 %v283, 126
      %v333 = vpop.permute.xlu0 %332
      %334 = vrot.lane.b32.xlu0 %v297, 126
      %v335 = vpop.permute.xlu0 %334
      %336 = vrot.lane.b32.xlu0 %v284, 126
      %v337 = vpop.permute.xlu0 %336
      %338 = vrot.lane.b32.xlu0 %v285, 126
      %v339 = vpop.permute.xlu0 %338
      %340 = vrot.lane.b32.xlu0 %v286, 126
      %v341 = vpop.permute.xlu0 %340
      %342 = vrot.lane.b32.xlu0 %v298, 126
      %v343 = vpop.permute.xlu0 %342
      %vm344 = vcmask 1031168
      %v345 = vsel %vm344, %v329, %v331
      %v346 = vsel %vm344, %v331, %v333
      %v347 = vsel %vm344, %v333, %v335
      %v348 = vsel %vm344, %v337, %v339
      %v349 = vsel %vm344, %v339, %v341
      %v350 = vsel %vm344, %v341, %v343
      %357 = vrot.lane.b32.xlu0 %v281, 110
      %v358 = vpop.permute.xlu0 %357
      %359 = vrot.lane.b32.xlu0 %v282, 110
      %v360 = vpop.permute.xlu0 %359
      %361 = vrot.lane.b32.xlu0 %v283, 110
      %v362 = vpop.permute.xlu0 %361
      %363 = vrot.lane.b32.xlu0 %v297, 110
      %v364 = vpop.permute.xlu0 %363
      %365 = vrot.lane.b32.xlu0 %v284, 110
      %v366 = vpop.permute.xlu0 %365
      %367 = vrot.lane.b32.xlu0 %v285, 110
      %v368 = vpop.permute.xlu0 %367
      %369 = vrot.lane.b32.xlu0 %v286, 110
      %v370 = vpop.permute.xlu0 %369
      %371 = vrot.lane.b32.xlu0 %v298, 110
      %v372 = vpop.permute.xlu0 %371
      %vm373 = vcmask 900096
      %v374 = vsel %vm373, %v358, %v360
      %v375 = vsel %vm373, %v360, %v362
      %v376 = vsel %vm373, %v362, %v364
      %v377 = vsel %vm373, %v366, %v368
      %v378 = vsel %vm373, %v368, %v370
      %v379 = vsel %vm373, %v370, %v372
      %386 = vrot.lane.b32.xlu0 %v281, 109
      %v387 = vpop.permute.xlu0 %386
      %388 = vrot.lane.b32.xlu0 %v282, 109
      %v389 = vpop.permute.xlu0 %388
      %390 = vrot.lane.b32.xlu0 %v283, 109
      %v391 = vpop.permute.xlu0 %390
      %392 = vrot.lane.b32.xlu0 %v297, 109
      %v393 = vpop.permute.xlu0 %392
      %394 = vrot.lane.b32.xlu0 %v284, 109
      %v395 = vpop.permute.xlu0 %394
      %396 = vrot.lane.b32.xlu0 %v285, 109
      %v397 = vpop.permute.xlu0 %396
      %398 = vrot.lane.b32.xlu0 %v286, 109
      %v399 = vpop.permute.xlu0 %398
      %400 = vrot.lane.b32.xlu0 %v298, 109
      %v401 = vpop.permute.xlu0 %400
      %vm402 = vcmask 891904
      %v403 = vsel %vm402, %v387, %v389
      %v404 = vsel %vm402, %v389, %v391
      %v405 = vsel %vm402, %v391, %v393
      %v406 = vsel %vm402, %v395, %v397
      %v407 = vsel %vm402, %v397, %v399
      %v408 = vsel %vm402, %v399, %v401
      %415 = vrot.lane.b32.xlu0 %v281, 108
      %v416 = vpop.permute.xlu0 %415
      %417 = vrot.lane.b32.xlu0 %v282, 108
      %v418 = vpop.permute.xlu0 %417
      %419 = vrot.lane.b32.xlu0 %v283, 108
      %v420 = vpop.permute.xlu0 %419
      %421 = vrot.lane.b32.xlu0 %v297, 108
      %v422 = vpop.permute.xlu0 %421
      %423 = vrot.lane.b32.xlu0 %v284, 108
      %v424 = vpop.permute.xlu0 %423
      %425 = vrot.lane.b32.xlu0 %v285, 108
      %v426 = vpop.permute.xlu0 %425
      %427 = vrot.lane.b32.xlu0 %v286, 108
      %v428 = vpop.permute.xlu0 %427
      %429 = vrot.lane.b32.xlu0 %v298, 108
      %v430 = vpop.permute.xlu0 %429
      %vm431 = vcmask 883712
      %v432 = vsel %vm431, %v416, %v418
      %v433 = vsel %vm431, %v418, %v420
      %v434 = vsel %vm431, %v420, %v422
      %v435 = vsel %vm431, %v424, %v426
      %v436 = vsel %vm431, %v426, %v428
      %v437 = vsel %vm431, %v428, %v430
      %444 = vrot.lane.b32.xlu0 %v281, 92
      %v445 = vpop.permute.xlu0 %444
      %446 = vrot.lane.b32.xlu0 %v282, 92
      %v447 = vpop.permute.xlu0 %446
      %448 = vrot.lane.b32.xlu0 %v283, 92
      %v449 = vpop.permute.xlu0 %448
      %450 = vrot.lane.b32.xlu0 %v297, 92
      %v451 = vpop.permute.xlu0 %450
      %452 = vrot.lane.b32.xlu0 %v284, 92
      %v453 = vpop.permute.xlu0 %452
      %454 = vrot.lane.b32.xlu0 %v285, 92
      %v455 = vpop.permute.xlu0 %454
      %456 = vrot.lane.b32.xlu0 %v286, 92
      %v457 = vpop.permute.xlu0 %456
      %458 = vrot.lane.b32.xlu0 %v298, 92
      %v459 = vpop.permute.xlu0 %458
      %vm460 = vcmask 752640
      %v461 = vsel %vm460, %v445, %v447
      %v462 = vsel %vm460, %v447, %v449
      %v463 = vsel %vm460, %v449, %v451
      %v464 = vsel %vm460, %v453, %v455
      %v465 = vsel %vm460, %v455, %v457
      %v466 = vsel %vm460, %v457, %v459
      %473 = vrot.lane.b32.xlu0 %v281, 91
      %v474 = vpop.permute.xlu0 %473
      %475 = vrot.lane.b32.xlu0 %v282, 91
      %v476 = vpop.permute.xlu0 %475
      %477 = vrot.lane.b32.xlu0 %v283, 91
      %v478 = vpop.permute.xlu0 %477
      %479 = vrot.lane.b32.xlu0 %v297, 91
      %v480 = vpop.permute.xlu0 %479
      %481 = vrot.lane.b32.xlu0 %v284, 91
      %v482 = vpop.permute.xlu0 %481
      %483 = vrot.lane.b32.xlu0 %v285, 91
      %v484 = vpop.permute.xlu0 %483
      %485 = vrot.lane.b32.xlu0 %v286, 91
      %v486 = vpop.permute.xlu0 %485
      %487 = vrot.lane.b32.xlu0 %v298, 91
      %v488 = vpop.permute.xlu0 %487
      %vm489 = vcmask 744448
      %v490 = vsel %vm489, %v474, %v476
      %v491 = vsel %vm489, %v476, %v478
      %v492 = vsel %vm489, %v478, %v480
      %v493 = vsel %vm489, %v482, %v484
      %v494 = vsel %vm489, %v484, %v486
      %v495 = vsel %vm489, %v486, %v488
      %502 = vrot.lane.b32.xlu0 %v281, 90
      %v503 = vpop.permute.xlu0 %502
      %504 = vrot.lane.b32.xlu0 %v282, 90
      %v505 = vpop.permute.xlu0 %504
      %506 = vrot.lane.b32.xlu0 %v283, 90
      %v507 = vpop.permute.xlu0 %506
      %508 = vrot.lane.b32.xlu0 %v297, 90
      %v509 = vpop.permute.xlu0 %508
      %510 = vrot.lane.b32.xlu0 %v284, 90
      %v511 = vpop.permute.xlu0 %510
      %512 = vrot.lane.b32.xlu0 %v285, 90
      %v513 = vpop.permute.xlu0 %512
      %514 = vrot.lane.b32.xlu0 %v286, 90
      %v515 = vpop.permute.xlu0 %514
      %516 = vrot.lane.b32.xlu0 %v298, 90
      %v517 = vpop.permute.xlu0 %516
      %vm518 = vcmask 736256
      %v519 = vsel %vm518, %v503, %v505
      %v520 = vsel %vm518, %v505, %v507
      %v521 = vsel %vm518, %v507, %v509
      %v522 = vsel %vm518, %v511, %v513
      %v523 = vsel %vm518, %v513, %v515
      %v524 = vsel %vm518, %v515, %v517
      %v531 = vld [vmem:[%s2] sm:$0xff]
      %v532 = vld [vmem:[%s2 + $0x8] sm:$0xf]
      %v533 = vld [vmem:[%s2 + $0xc] sm:$0xff]
      %v534 = vld [vmem:[%s2 + $0x14] sm:$0xf]
      %v535 = vld [vmem:[%s2 + $0x18] sm:$0xff]
      %v536 = vld [vmem:[%s2 + $0x20] sm:$0xf]
      %v537 = vld [vmem:[%s2 + $0x24] sm:$0xff]
      %v538 = vld [vmem:[%s2 + $0x2c] sm:$0xf]
      %v539 = vld [vmem:[%s3] sm:$0xff]
      %v540 = vld [vmem:[%s3 + $0x8] sm:$0xff]
      %v541 = vld [vmem:[%s3 + $0x10] sm:$0xff]
      %v542 = vld [vmem:[%s3 + $0x18] sm:$0xff]
      %544 = vset.pattern.permute.xlu0 0
      %545 = vperm.xlu0 %544, %v539
      %v546 = vpop.permute.xlu0 %545
      %549 = vset.pattern.permute.xlu0 0
      %550 = vperm.xlu0 %549, %v540
      %v551 = vpop.permute.xlu0 %550
      %554 = vset.pattern.permute.xlu0 0
      %555 = vperm.xlu0 %554, %v541
      %v556 = vpop.permute.xlu0 %555
      %559 = vset.pattern.permute.xlu0 0
      %560 = vperm.xlu0 %559, %v542
      %v561 = vpop.permute.xlu0 %560
      %v571 = vunpack.c.l.b16 %v531
      %v572 = vunpack.c.h.b16 %v531
      %v573 = vunpack.c.l.b16 %v532
      %v574 = vunpack.c.l.b16 %v533
      %v575 = vunpack.c.h.b16 %v533
      %v576 = vunpack.c.l.b16 %v534
      %v577 = vunpack.c.l.b16 %v535
      %v578 = vunpack.c.h.b16 %v535
      %v579 = vunpack.c.l.b16 %v536
      %v580 = vunpack.c.l.b16 %v537
      %v581 = vunpack.c.h.b16 %v537
      %v582 = vunpack.c.l.b16 %v538
      %v583 = vpack.c.b16 %v574, %v571
      %v584 = vpack.c.b16 %v575, %v572
      %v585 = vpack.c.b16 %v576, %v573
      %v586 = vpack.c.b16 %v580, %v577
      %v587 = vpack.c.b16 %v581, %v578
      %v588 = vpack.c.b16 %v582, %v579
      %vm593 = vcmask 261120
      %v595 = vsel %vm593, %v585, 0
      %v598 = vsel %vm593, %v588, 0
      %600 = vmatprep.subr.bf16.mxu0 %v282
      %601 = vmatpush1.bf16.msra.mxu0 %v281
      %602 = vmatprep.subr.bf16.mxu0 %v285
      %603 = vmatpush1.bf16.msra.mxu0 %v284
      %604 = vmatprep.subr.bf16.mxu0 %v317
      %605 = vmatpush1.bf16.msra.mxu0 %v316
      %606 = vmatprep.subr.bf16.mxu0 %v320
      %607 = vmatpush1.bf16.msra.mxu0 %v319
      %608 = vmatprep.subr.bf16.mxu0 %v346
      %609 = vmatpush1.bf16.msra.mxu0 %v345
      %610 = vmatprep.subr.bf16.mxu0 %v349
      %611 = vmatpush1.bf16.msra.mxu0 %v348
      %612 = vmatprep.subr.bf16.mxu0 %v375
      %613 = vmatpush1.bf16.msra.mxu0 %v374
      %614 = vmatprep.subr.bf16.mxu0 %v378
      %615 = vmatpush1.bf16.msra.mxu0 %v377
      %616 = vmatprep.subr.bf16.mxu0 %v404
      %617 = vmatpush1.bf16.msra.mxu0 %v403
      %618 = vmatprep.subr.bf16.mxu0 %v407
      %619 = vmatpush1.bf16.msra.mxu0 %v406
      %620 = vmatprep.subr.bf16.mxu0 %v433
      %621 = vmatpush1.bf16.msra.mxu0 %v432
      %622 = vmatprep.subr.bf16.mxu0 %v436
      %623 = vmatpush1.bf16.msra.mxu0 %v435
      %624 = vmatprep.subr.bf16.mxu0 %v462
      %625 = vmatpush1.bf16.msra.mxu0 %v461
      %626 = vmatprep.subr.bf16.mxu0 %v465
      %627 = vmatpush1.bf16.msra.mxu0 %v464
      %628 = vmatprep.subr.bf16.mxu0 %v491
      %629 = vmatpush1.bf16.msra.mxu0 %v490
      %630 = vmatprep.subr.bf16.mxu0 %v494
      %631 = vmatpush1.bf16.msra.mxu0 %v493
      %632 = vmatprep.mubr.bf16.mxu0 %v584
      %633 = vmatmul.mubr.bf16.gmra.mrb[0].mxu0 %v583
      %v634 = vpop.f32.mrb[0].mxu0
      %v635 = vadd.f32 %v546, %v634
      %v636 = vpop.f32.mrb[0].mxu0
      %v637 = vadd.f32 %v546, %v636
      %v638 = vpop.f32.mrb[0].mxu0
      %v639 = vadd.f32 %v551, %v638
      %v640 = vpop.f32.mrb[0].mxu0
      %v641 = vadd.f32 %v551, %v640
      %642 = vmatprep.mubr.bf16.mxu0 %v587
      %643 = vmatmul.mubr.bf16.gmra.mrb[0].mxu0 %v586
      %v644 = vpop.f32.mrb[0].mxu0
      %v645 = vadd.f32 %v556, %v644
      %v646 = vpop.f32.mrb[0].mxu0
      %v647 = vadd.f32 %v556, %v646
      %v648 = vpop.f32.mrb[0].mxu0
      %v649 = vadd.f32 %v561, %v648
      %v650 = vpop.f32.mrb[0].mxu0
      %v651 = vadd.f32 %v561, %v650
      %652 = vdwg.mxu0
      %653 = vmatprep.subr.bf16.mxu0 %v520
      %654 = vmatpush1.bf16.msra.mxu0 %v519
      %655 = vmatprep.subr.bf16.mxu0 %v523
      %656 = vmatpush1.bf16.msra.mxu0 %v522
      %657 = vmatprep.subr.bf16.mxu0 0
      %658 = vmatpush1.bf16.msra.mxu0 0
      %659 = vmatprep.subr.bf16.mxu0 0
      %660 = vmatpush1.bf16.msra.mxu0 0
      %661 = vmatprep.subr.bf16.mxu0 0
      %662 = vmatpush1.bf16.msra.mxu0 0
      %663 = vmatprep.subr.bf16.mxu0 0
      %664 = vmatpush1.bf16.msra.mxu0 0
      %665 = vmatprep.subr.bf16.mxu0 0
      %666 = vmatpush1.bf16.msra.mxu0 0
      %667 = vmatprep.subr.bf16.mxu0 0
      %668 = vmatpush1.bf16.msra.mxu0 0
      %669 = vmatprep.subr.bf16.mxu0 0
      %670 = vmatpush1.bf16.msra.mxu0 0
      %671 = vmatprep.subr.bf16.mxu0 0
      %672 = vmatpush1.bf16.msra.mxu0 0
      %673 = vmatprep.subr.bf16.mxu0 0
      %674 = vmatpush1.bf16.msra.mxu0 0
      %675 = vmatprep.subr.bf16.mxu0 0
      %676 = vmatpush1.bf16.msra.mxu0 0
      %677 = vmatprep.subr.bf16.mxu0 0
      %678 = vmatpush1.bf16.msra.mxu0 0
      %679 = vmatprep.subr.bf16.mxu0 0
      %680 = vmatpush1.bf16.msra.mxu0 0
      %681 = vmatprep.subr.bf16.mxu0 0
      %682 = vmatpush1.bf16.msra.mxu0 0
      %683 = vmatprep.subr.bf16.mxu0 0
      %684 = vmatpush1.bf16.msra.mxu0 0
      %685 = vmatprep.mubr.bf16.mxu0 0
      %686 = vmatmul.mubr.bf16.gmra.mrb[0].mxu0 %v595
      %v687 = vpop.f32.mrb[0].mxu0
      %v688 = vadd.f32 %v635, %v687
      %v689 = vpop.f32.mrb[0].mxu0
      %v690 = vadd.f32 %v637, %v689
      %v691 = vpop.f32.mrb[0].mxu0
      %v692 = vadd.f32 %v639, %v691
      %v693 = vpop.f32.mrb[0].mxu0
      %v694 = vadd.f32 %v641, %v693
      %695 = vmatprep.mubr.bf16.mxu0 0
      %696 = vmatmul.mubr.bf16.gmra.mrb[0].mxu0 %v598
      %v697 = vpop.f32.mrb[0].mxu0
      %v698 = vadd.f32 %v645, %v697
      %v699 = vpop.f32.mrb[0].mxu0
      %v700 = vadd.f32 %v647, %v699
      %v701 = vpop.f32.mrb[0].mxu0
      %v702 = vadd.f32 %v649, %v701
      %v703 = vpop.f32.mrb[0].mxu0
      %v704 = vadd.f32 %v651, %v703
      %705 = vdwg.mxu0
      %706 = vmatprep.subr.bf16.mxu0 0
      %707 = vmatpush1.bf16.msra.mxu0 %v283
      %708 = vmatprep.subr.bf16.mxu0 0
      %709 = vmatpush1.bf16.msra.mxu0 %v286
      %710 = vmatprep.subr.bf16.mxu0 0
      %711 = vmatpush1.bf16.msra.mxu0 %v318
      %712 = vmatprep.subr.bf16.mxu0 0
      %713 = vmatpush1.bf16.msra.mxu0 %v321
      %714 = vmatprep.subr.bf16.mxu0 0
      %715 = vmatpush1.bf16.msra.mxu0 %v347
      %716 = vmatprep.subr.bf16.mxu0 0
      %717 = vmatpush1.bf16.msra.mxu0 %v350
      %718 = vmatprep.subr.bf16.mxu0 0
      %719 = vmatpush1.bf16.msra.mxu0 %v376
      %720 = vmatprep.subr.bf16.mxu0 0
      %721 = vmatpush1.bf16.msra.mxu0 %v379
      %722 = vmatprep.subr.bf16.mxu0 0
      %723 = vmatpush1.bf16.msra.mxu0 %v405
      %724 = vmatprep.subr.bf16.mxu0 0
      %725 = vmatpush1.bf16.msra.mxu0 %v408
      %726 = vmatprep.subr.bf16.mxu0 0
      %727 = vmatpush1.bf16.msra.mxu0 %v434
      %728 = vmatprep.subr.bf16.mxu0 0
      %729 = vmatpush1.bf16.msra.mxu0 %v437
      %730 = vmatprep.subr.bf16.mxu0 0
      %731 = vmatpush1.bf16.msra.mxu0 %v463
      %732 = vmatprep.subr.bf16.mxu0 0
      %733 = vmatpush1.bf16.msra.mxu0 %v466
      %734 = vmatprep.subr.bf16.mxu0 0
      %735 = vmatpush1.bf16.msra.mxu0 %v492
      %736 = vmatprep.subr.bf16.mxu0 0
      %737 = vmatpush1.bf16.msra.mxu0 %v495
      %738 = vmatprep.mubr.bf16.mxu0 %v584
      %739 = vmatmul.mubr.bf16.gmra.mrb[0].mxu0 %v583
      %v740 = vpop.f32.mrb[0].mxu0
      %v741 = vadd.f32 %v546, %v740
      %v742 = vpop.f32.mrb[0].mxu0
      %v743 = vpop.f32.mrb[0].mxu0
      %v744 = vadd.f32 %v551, %v743
      %v745 = vpop.f32.mrb[0].mxu0
      %746 = vmatprep.mubr.bf16.mxu0 %v587
      %747 = vmatmul.mubr.bf16.gmra.mrb[0].mxu0 %v586
      %v748 = vpop.f32.mrb[0].mxu0
      %v749 = vadd.f32 %v556, %v748
      %v750 = vpop.f32.mrb[0].mxu0
      %v751 = vpop.f32.mrb[0].mxu0
      %v752 = vadd.f32 %v561, %v751
      %v753 = vpop.f32.mrb[0].mxu0
      %754 = vdwg.mxu0
      %755 = vmatprep.subr.bf16.mxu0 0
      %756 = vmatpush1.bf16.msra.mxu0 %v521
      %757 = vmatprep.subr.bf16.mxu0 0
      %758 = vmatpush1.bf16.msra.mxu0 %v524
      %759 = vmatprep.subr.bf16.mxu0 0
      %760 = vmatpush1.bf16.msra.mxu0 0
      %761 = vmatprep.subr.bf16.mxu0 0
      %762 = vmatpush1.bf16.msra.mxu0 0
      %763 = vmatprep.subr.bf16.mxu0 0
      %764 = vmatpush1.bf16.msra.mxu0 0
      %765 = vmatprep.subr.bf16.mxu0 0
      %766 = vmatpush1.bf16.msra.mxu0 0
      %767 = vmatprep.subr.bf16.mxu0 0
      %768 = vmatpush1.bf16.msra.mxu0 0
      %769 = vmatprep.subr.bf16.mxu0 0
      %770 = vmatpush1.bf16.msra.mxu0 0
      %771 = vmatprep.subr.bf16.mxu0 0
      %772 = vmatpush1.bf16.msra.mxu0 0
      %773 = vmatprep.subr.bf16.mxu0 0
      %774 = vmatpush1.bf16.msra.mxu0 0
      %775 = vmatprep.subr.bf16.mxu0 0
      %776 = vmatpush1.bf16.msra.mxu0 0
      %777 = vmatprep.subr.bf16.mxu0 0
      %778 = vmatpush1.bf16.msra.mxu0 0
      %779 = vmatprep.subr.bf16.mxu0 0
      %780 = vmatpush1.bf16.msra.mxu0 0
      %781 = vmatprep.subr.bf16.mxu0 0
      %782 = vmatpush1.bf16.msra.mxu0 0
      %783 = vmatprep.subr.bf16.mxu0 0
      %784 = vmatpush1.bf16.msra.mxu0 0
      %785 = vmatprep.subr.bf16.mxu0 0
      %786 = vmatpush1.bf16.msra.mxu0 0
      %787 = vmatprep.mubr.bf16.mxu0 0
      %788 = vmatmul.mubr.bf16.gmra.mrb[0].mxu0 %v595
      %v789 = vpop.f32.mrb[0].mxu0
      %v790 = vadd.f32 %v741, %v789
      %v791 = vpop.f32.mrb[0].mxu0
      %v792 = vpop.f32.mrb[0].mxu0
      %v793 = vadd.f32 %v744, %v792
      %v794 = vpop.f32.mrb[0].mxu0
      %795 = vmatprep.mubr.bf16.mxu0 0
      %796 = vmatmul.mubr.bf16.gmra.mrb[0].mxu0 %v598
      %v797 = vpop.f32.mrb[0].mxu0
      %v798 = vadd.f32 %v749, %v797
      %v799 = vpop.f32.mrb[0].mxu0
      %v800 = vpop.f32.mrb[0].mxu0
      %v801 = vadd.f32 %v752, %v800
      %v802 = vpop.f32.mrb[0].mxu0
      %803 = vdwg.mxu0
      %v804 = vmax.f32 %v688, 0.0
      %v805 = vmax.f32 %v690, 0.0
      %v806 = vmax.f32 %v790, 0.0
      %v807 = vmax.f32 %v692, 0.0
      %v808 = vmax.f32 %v694, 0.0
      %v809 = vmax.f32 %v793, 0.0
      %v810 = vmax.f32 %v698, 0.0
      %v811 = vmax.f32 %v700, 0.0
      %v812 = vmax.f32 %v798, 0.0
      %v813 = vmax.f32 %v702, 0.0
      %v814 = vmax.f32 %v704, 0.0
      %v815 = vmax.f32 %v801, 0.0
      %v816 = vld [vmem:[%s4] sm:$0xf]
      %v817 = vld [vmem:[%s4 + $0x4] sm:$0xf]
      %v818 = vpack.c.bf16 %v807, %v804
      %v819 = vpack.c.bf16 %v808, %v805
      %v820 = vpack.c.bf16 %v809, %v806
      %v821 = vpack.c.bf16 %v813, %v810
      %v822 = vpack.c.bf16 %v814, %v811
      %v823 = vpack.c.bf16 %v815, %v812
      %v824 = vld [vmem:[%s5] sm:$0xff]
      %v825 = vld [vmem:[%s5 + $0x8] sm:$0x7f]
      %827 = vset.pattern.permute.xlu0 0
      %828 = vperm.xlu0 %827, %v824
      %v829 = vpop.permute.xlu0 %828
      %832 = vset.pattern.permute.xlu0 0
      %833 = vperm.xlu0 %832, %v825
      %v834 = vpop.permute.xlu0 %833
      %v838 = vunpack.c.l.b16 %v816
      %v839 = vunpack.c.l.b16 %v817
      %v840 = vpack.c.b16 %v839, %v838
      %v842 = vsel %vm593, %v840, 0
      %844 = vmatprep.subr.bf16.mxu0 %v819
      %845 = vmatpush1.bf16.msra.mxu0 %v818
      %846 = vmatprep.subr.bf16.mxu0 %v822
      %847 = vmatpush1.bf16.msra.mxu0 %v821
      %848 = vmatprep.subr.bf16.mxu0 0
      %849 = vmatpush1.bf16.msra.mxu0 0
      %850 = vmatprep.subr.bf16.mxu0 0
      %851 = vmatpush1.bf16.msra.mxu0 0
      %852 = vmatprep.subr.bf16.mxu0 0
      %853 = vmatpush1.bf16.msra.mxu0 0
      %854 = vmatprep.subr.bf16.mxu0 0
      %855 = vmatpush1.bf16.msra.mxu0 0
      %856 = vmatprep.subr.bf16.mxu0 0
      %857 = vmatpush1.bf16.msra.mxu0 0
      %858 = vmatprep.subr.bf16.mxu0 0
      %859 = vmatpush1.bf16.msra.mxu0 0
      %860 = vmatprep.subr.bf16.mxu0 0
      %861 = vmatpush1.bf16.msra.mxu0 0
      %862 = vmatprep.subr.bf16.mxu0 0
      %863 = vmatpush1.bf16.msra.mxu0 0
      %864 = vmatprep.subr.bf16.mxu0 0
      %865 = vmatpush1.bf16.msra.mxu0 0
      %866 = vmatprep.subr.bf16.mxu0 0
      %867 = vmatpush1.bf16.msra.mxu0 0
      %868 = vmatprep.subr.bf16.mxu0 0
      %869 = vmatpush1.bf16.msra.mxu0 0
      %870 = vmatprep.subr.bf16.mxu0 0
      %871 = vmatpush1.bf16.msra.mxu0 0
      %872 = vmatprep.subr.bf16.mxu0 0
      %873 = vmatpush1.bf16.msra.mxu0 0
      %874 = vmatprep.subr.bf16.mxu0 0
      %875 = vmatpush1.bf16.msra.mxu0 0
      %876 = vmatprep.mubr.bf16.mxu0 0
      %877 = vmatmul.mubr.bf16.gmra.mrb[0].mxu0 %v842
      %v878 = vpop.f32.mrb[0].mxu0
      %v879 = vadd.f32 %v829, %v878
      %v880 = vpop.f32.mrb[0].mxu0
      %v881 = vadd.f32 %v829, %v880
      %v882 = vpop.f32.mrb[0].mxu0
      %v883 = vadd.f32 %v834, %v882
      %v884 = vpop.f32.mrb[0].mxu0
      %v885 = vadd.f32 %v834, %v884
      %886 = vdwg.mxu0
      %887 = vmatprep.subr.bf16.mxu0 0
      %888 = vmatpush1.bf16.msra.mxu0 %v820
      %889 = vmatprep.subr.bf16.mxu0 0
      %890 = vmatpush1.bf16.msra.mxu0 %v823
      %891 = vmatprep.subr.bf16.mxu0 0
      %892 = vmatpush1.bf16.msra.mxu0 0
      %893 = vmatprep.subr.bf16.mxu0 0
      %894 = vmatpush1.bf16.msra.mxu0 0
      %895 = vmatprep.subr.bf16.mxu0 0
      %896 = vmatpush1.bf16.msra.mxu0 0
      %897 = vmatprep.subr.bf16.mxu0 0
      %898 = vmatpush1.bf16.msra.mxu0 0
      %899 = vmatprep.subr.bf16.mxu0 0
      %900 = vmatpush1.bf16.msra.mxu0 0
      %901 = vmatprep.subr.bf16.mxu0 0
      %902 = vmatpush1.bf16.msra.mxu0 0
      %903 = vmatprep.subr.bf16.mxu0 0
      %904 = vmatpush1.bf16.msra.mxu0 0
      %905 = vmatprep.subr.bf16.mxu0 0
      %906 = vmatpush1.bf16.msra.mxu0 0
      %907 = vmatprep.subr.bf16.mxu0 0
      %908 = vmatpush1.bf16.msra.mxu0 0
      %909 = vmatprep.subr.bf16.mxu0 0
      %910 = vmatpush1.bf16.msra.mxu0 0
      %911 = vmatprep.subr.bf16.mxu0 0
      %912 = vmatpush1.bf16.msra.mxu0 0
      %913 = vmatprep.subr.bf16.mxu0 0
      %914 = vmatpush1.bf16.msra.mxu0 0
      %915 = vmatprep.subr.bf16.mxu0 0
      %916 = vmatpush1.bf16.msra.mxu0 0
      %917 = vmatprep.subr.bf16.mxu0 0
      %918 = vmatpush1.bf16.msra.mxu0 0
      %919 = vmatprep.mubr.bf16.mxu0 0
      %920 = vmatmul.mubr.bf16.gmra.mrb[0].mxu0 %v842
      %v921 = vpop.f32.mrb[0].mxu0
      %v922 = vadd.f32 %v829, %v921
      %v923 = vpop.f32.mrb[0].mxu0
      %v924 = vpop.f32.mrb[0].mxu0
      %v925 = vadd.f32 %v834, %v924
      %v926 = vpop.f32.mrb[0].mxu0
      %927 = vdwg.mxu0
      %v928 = vld [vmem:[%s1] ss:$8 sm:$0x7]
      %s929 = scalar_lea.vmem %s1, 1
      %v930 = vld [vmem:[%s929] ss:$8 sm:$0x7]
      %v931 = vld [vmem:[%s1] sm:$0x1c]
      %v932 = vld [vmem:[%s1 + $0x8] sm:$0x1c]
      %v933 = vld [vmem:[%s1 + $0x10] sm:$0x1c]
      %v934 = vld [vmem:[%s1] sm:$0xe0]
      %v935 = vld [vmem:[%s1 + $0x8] sm:$0xe0]
      %v936 = vld [vmem:[%s1 + $0x10] sm:$0xe0]
      %v940 = vrot.slane %v879, 3
      %v941 = vrot.slane %v881, 3
      %v942 = vrot.slane %v922, 3
      %v946 = vsub.f32 %v879, %v940
      %v947 = vsub.f32 %v881, %v941
      %v948 = vsub.f32 %v922, %v942
      %v949 = vmul.f32 %v946, 1.442695
      %v950 = vpow.pop %v949
      %v951 = vmul.f32 %v947, 1.442695
      %v952 = vpow.pop %v951
      %v953 = vmul.f32 %v948, 1.442695
      %v954 = vpow.pop %v953
      %v955 = vadd.f32 %v950, 1.0
      %v956 = vadd.f32 %v952, 1.0
      %v957 = vadd.f32 %v954, 1.0
      %v958 = vrcp.pop %v955
      %v959 = vrcp.pop %v956
      %v960 = vrcp.pop %v957
      %v962 = vlaneseq
      %v963 = vshrl.u32 %v962, 7
      %v964 = vsub.s32 0, %v963
      %v965 = vrot.slane %v928, %v964
      %v966 = vlaneseq
      %v967 = vshrl.u32 %v966, 7
      %v968 = vsub.s32 1, %v967
      %v969 = vrot.slane %v928, %v968
      %v970 = vlaneseq
      %v971 = vshrl.u32 %v970, 7
      %v972 = vsub.s32 2, %v971
      %v973 = vrot.slane %v928, %v972
      %v977 = vadd.f32 %v879, %v965
      %v978 = vadd.f32 %v881, %v969
      %v979 = vadd.f32 %v922, %v973
      %v980 = vadd.f32 %v883, %v965
      %v981 = vadd.f32 %v885, %v969
      %v982 = vadd.f32 %v925, %v973
      %v984 = vlaneseq
      %v985 = vshrl.u32 %v984, 7
      %v986 = vsub.s32 0, %v985
      %v987 = vrot.slane %v930, %v986
      %v988 = vlaneseq
      %v989 = vshrl.u32 %v988, 7
      %v990 = vsub.s32 1, %v989
      %v991 = vrot.slane %v930, %v990
      %v992 = vlaneseq
      %v993 = vshrl.u32 %v992, 7
      %v994 = vsub.s32 2, %v993
      %v995 = vrot.slane %v930, %v994
      %v999 = vadd.f32 %v883, %v987
      %v1000 = vadd.f32 %v885, %v991
      %v1001 = vadd.f32 %v925, %v995
      %v1002 = vmul.f32 %v883, 1.442695
      %v1003 = vpow.pop %v1002
      %v1004 = vmul.f32 %v885, 1.442695
      %v1005 = vpow.pop %v1004
      %v1006 = vmul.f32 %v925, 1.442695
      %v1007 = vpow.pop %v1006
      %v1011 = vrot.slane %v931, 6
      %v1012 = vrot.slane %v932, 6
      %v1013 = vrot.slane %v933, 6
      %v1017 = vmul.f32 %v1003, %v1011
      %v1018 = vmul.f32 %v1005, %v1012
      %v1019 = vmul.f32 %v1007, %v1013
      %v1023 = vrot.slane %v934, 1
      %v1024 = vrot.slane %v935, 1
      %v1025 = vrot.slane %v936, 1
      %v1029 = vmul.f32 %v1003, %v1023
      %v1030 = vmul.f32 %v1005, %v1024
      %v1031 = vmul.f32 %v1007, %v1025
      %v1032 = vmul.f32 %v1017, 0.5
      %v1033 = vmul.f32 %v1018, 0.5
      %v1034 = vmul.f32 %v1019, 0.5
      %v1038 = vrot.slane %v1032, 6
      %v1039 = vrot.slane %v1033, 6
      %v1040 = vrot.slane %v1034, 6
      %v1044 = vsub.f32 %v977, %v1038
      %v1045 = vsub.f32 %v978, %v1039
      %v1046 = vsub.f32 %v979, %v1040
      %v1047 = vsub.f32 %v980, %v1038
      %v1048 = vsub.f32 %v981, %v1039
      %v1049 = vsub.f32 %v982, %v1040
      %v1050 = vmax.f32 %v1044, 0.0
      %v1051 = vmax.f32 %v1045, 0.0
      %v1052 = vmax.f32 %v1046, 0.0
      %v1053 = vmax.f32 %v1047, 0.0
      %v1054 = vmax.f32 %v1048, 0.0
      %v1055 = vmax.f32 %v1049, 0.0
      %v1056 = vmin.f32 %v1050, 15.0
      %v1057 = vmin.f32 %v1051, 15.0
      %v1058 = vmin.f32 %v1052, 15.0
      %v1059 = vmin.f32 %v1053, 15.0
      %v1060 = vmin.f32 %v1054, 15.0
      %v1061 = vmin.f32 %v1055, 15.0
      %v1062 = vmul.f32 %v1029, 0.5
      %v1063 = vmul.f32 %v1030, 0.5
      %v1064 = vmul.f32 %v1031, 0.5
      %v1068 = vrot.slane %v1062, 3
      %v1069 = vrot.slane %v1063, 3
      %v1070 = vrot.slane %v1064, 3
      %v1074 = vsub.f32 %v999, %v1068
      %v1075 = vsub.f32 %v1000, %v1069
      %v1076 = vsub.f32 %v1001, %v1070
      %v1077 = vmax.f32 %v1074, 0.0
      %v1078 = vmax.f32 %v1075, 0.0
      %v1079 = vmax.f32 %v1076, 0.0
      %v1080 = vmin.f32 %v1077, 15.0
      %v1081 = vmin.f32 %v1078, 15.0
      %v1082 = vmin.f32 %v1079, 15.0
      %v1083 = vadd.f32 %v977, %v1038
      %v1084 = vadd.f32 %v978, %v1039
      %v1085 = vadd.f32 %v979, %v1040
      %v1086 = vadd.f32 %v980, %v1038
      %v1087 = vadd.f32 %v981, %v1039
      %v1088 = vadd.f32 %v982, %v1040
      %v1089 = vmax.f32 %v1083, 0.0
      %v1090 = vmax.f32 %v1084, 0.0
      %v1091 = vmax.f32 %v1085, 0.0
      %v1092 = vmax.f32 %v1086, 0.0
      %v1093 = vmax.f32 %v1087, 0.0
      %v1094 = vmax.f32 %v1088, 0.0
      %v1095 = vmin.f32 %v1089, 15.0
      %v1096 = vmin.f32 %v1090, 15.0
      %v1097 = vmin.f32 %v1091, 15.0
      %v1098 = vmin.f32 %v1092, 15.0
      %v1099 = vmin.f32 %v1093, 15.0
      %v1100 = vmin.f32 %v1094, 15.0
      %v1101 = vadd.f32 %v999, %v1068
      %v1102 = vadd.f32 %v1000, %v1069
      %v1103 = vadd.f32 %v1001, %v1070
      %v1104 = vmax.f32 %v1101, 0.0
      %v1105 = vmax.f32 %v1102, 0.0
      %v1106 = vmax.f32 %v1103, 0.0
      %v1107 = vmin.f32 %v1104, 15.0
      %v1108 = vmin.f32 %v1105, 15.0
      %v1109 = vmin.f32 %v1106, 15.0
      %1110 = vst [vmem:[%s251] sm:$0x7] %v958
      %1111 = vst [vmem:[%s251 + $0x8] sm:$0x7] %v959
      %1112 = vst [vmem:[%s251 + $0x10] sm:$0x7] %v960
      %vm1119 = vcmask 1044480
      %v1120 = vrot.slane %v1056, 3
      %v1121 = vrot.slane %v1059, 3
      %v1122 = vsel %vm1119, %v1120, %v1121
      %v1123 = vrot.slane %v1057, 3
      %v1124 = vrot.slane %v1060, 3
      %v1125 = vsel %vm1119, %v1123, %v1124
      %v1126 = vrot.slane %v1058, 3
      %v1127 = vrot.slane %v1061, 3
      %v1128 = vsel %vm1119, %v1126, %v1127
      %1132 = vst [vmem:[%s251] sm:$0x38] %v1122
      %1133 = vst [vmem:[%s251 + $0x8] sm:$0x38] %v1125
      %1134 = vst [vmem:[%s251 + $0x10] sm:$0x38] %v1128
      %v1138 = vrot.slane %v1080, 3
      %v1139 = vrot.slane %v1081, 3
      %v1140 = vrot.slane %v1082, 3
      %1144 = vst [vmem:[%s251] sm:$0xc0] %v1138
      %1145 = vst [vmem:[%s251 + $0x8] sm:$0xc0] %v1139
      %1146 = vst [vmem:[%s251 + $0x10] sm:$0xc0] %v1140
      %1147 = vst [vmem:[%s251 + $0x18] sm:$0x1] %v1138
      %1148 = vst [vmem:[%s251 + $0x20] sm:$0x1] %v1139
      %1149 = vst [vmem:[%s251 + $0x28] sm:$0x1] %v1140
      %vm1156 = vcmask 1042432
      %v1157 = vrot.slane %v1095, 5
      %v1158 = vrot.slane %v1098, 5
      %v1159 = vsel %vm1156, %v1157, %v1158
      %v1160 = vrot.slane %v1096, 5
      %v1161 = vrot.slane %v1099, 5
      %v1162 = vsel %vm1156, %v1160, %v1161
      %v1163 = vrot.slane %v1097, 5
      %v1164 = vrot.slane %v1100, 5
      %v1165 = vsel %vm1156, %v1163, %v1164
      %1169 = vst [vmem:[%s251 + $0x18] sm:$0xe] %v1159
      %1170 = vst [vmem:[%s251 + $0x20] sm:$0xe] %v1162
      %1171 = vst [vmem:[%s251 + $0x28] sm:$0xe] %v1165
      %v1175 = vrot.slane %v1107, 5
      %v1176 = vrot.slane %v1108, 5
      %v1177 = vrot.slane %v1109, 5
      %1181 = vst [vmem:[%s251 + $0x18] sm:$0x70] %v1175
      %1182 = vst [vmem:[%s251 + $0x20] sm:$0x70] %v1176
      %1183 = vst [vmem:[%s251 + $0x28] sm:$0x70] %v1177
      %p1184 = scmp.lt.s32.totalorder %s17, 1
      %s1185 = scalar_select %p1184, %s17, 1
      %s1186 = smul.addr %s1185, 6
      %s1187 = smul.addr %s1186, 8
      %s1188 = scalar_lea.vmem %s6, %s1187
      // Predicated region
      $region45: #{device_fn.1} parent=43 // pred_check
        %p1189 = pneg %p166
      $region46: #{device_fn.1} parent=43 // pred_check_branch
        %1191 = sbr.rel (%p1189) target = $region48
      $region47: #{device_fn.1} parent=43 // pred_region
        _
      $region48: #{device_fn.1} parent=43 // pred_fallthru
        _
    $region44: #{device_fn.1} parent=5 // pred_fallthru
      _
    %p1192 = scmp.le.s32.totalorder 2, %s12
    // Predicated region
    $region49: #{device_fn.1} parent=5 // pred_check
      %p1193 = pneg %p1192
    $region50: #{device_fn.1} parent=5 // pred_check_branch
      %1195 = sbr.rel (%p1193) target = $region52
    $region51: #{device_fn.1} parent=5 // pred_region
      %s1196 = ssub.s32 %s12, 2
      // Predicated region
      $region53: #{device_fn.1} parent=51 // pred_check
        %p1197 = pneg %p172
      $region54: #{device_fn.1} parent=51 // pred_check_branch
        %1199 = sbr.rel (%p1197) target = $region56
      $region55: #{device_fn.1} parent=51 // pred_region
        %p1200 = scmp.lt.s32.totalorder %s18, 1
        %s1201 = scalar_select %p1200, %s18, 1
        %s1202 = smul.addr %s1201, 6
        %s1203 = smul.addr %s1202, 8
        %s1204 = scalar_lea.vmem %s6, %s1203
      $region56: #{device_fn.1} parent=51 // pred_fallthru
        _
    $region52: #{device_fn.1} parent=5 // pred_fallthru
      _
  $region6: #{device_fn.1} parent=0 // loop_footer
    %s16 = sadd.s32 1, %s12
  $region7: #{device_fn.1} parent=0 // loop_footer_branch
    %11 = sbr.rel target = $region3
  $region8: #{device_fn.1} parent=0 // loop_exit
    _

</llo_original>
